<compile_context>
chip_gen: v5e
topology: v5e:2x2
jax: 0.10.0
libtpu: 0.0.40
codegen_flags: <defaults>
</compile_context>

<pallas_src>
import functools

import jax
import jax.numpy as jnp
from jax.experimental import pallas as pl
from jax.experimental.pallas import tpu as pltpu


def _graphconv_kernel(adj_ref, x_ref, w_ref, *rest,
                      add_self, use_bias, normalize, reorder):
    # Per-step blocks: adj (TB, N, N) native dtype, x (TB, N, Din) native dtype,
    # w (Din, Dp) bf16, [bias (1, Dp) f32], out (TB, N, Dp) f32.
    if use_bias:
        b_ref, o_ref = rest
    else:
        (o_ref,) = rest

    tb, n, _ = adj_ref.shape
    din = x_ref.shape[-1]
    dp = w_ref.shape[-1]

    adj = adj_ref[...].astype(jnp.bfloat16)       # cast on-chip (no extra HBM pass)
    x = x_ref[...]                                # (TB, N, Din), native dtype

    if reorder:
        # (adj@x + x) @ W  ==  adj@(x@W) + x@W ; cheaper when Dp < Din because the
        # MXU-underfilled per-graph aggregation matmul runs at width Dp, not Din.
        x2 = x.reshape(tb * n, din).astype(jnp.bfloat16)
        xw = jnp.dot(x2, w_ref[...],
                     preferred_element_type=jnp.float32)       # (TB*N, Dp) f32
        xw3 = xw.reshape(tb, n, dp)
        h = jnp.einsum("bnm,bmd->bnd", adj, xw3.astype(jnp.bfloat16),
                       preferred_element_type=jnp.float32)     # (TB, N, Dp) f32
        if add_self:
            h = h + xw3
        y = h.reshape(tb * n, dp)
    else:
        # Hot path 1: neighborhood aggregation — batched MXU matmul, f32 accumulate.
        h = jnp.einsum("bnm,bmd->bnd", adj, x.astype(jnp.bfloat16),
                       preferred_element_type=jnp.float32)     # (TB, N, Din) f32
        if add_self:
            h = h + x.astype(jnp.float32)
        # Hot path 2: feature transform — one fused tall MXU matmul.
        h2 = h.reshape(tb * n, din).astype(jnp.bfloat16)
        y = jnp.dot(h2, w_ref[...],
                    preferred_element_type=jnp.float32)        # (TB*N, Dp) f32

    if use_bias:
        y = y + b_ref[...]                    # (1, Dp) f32, broadcast over rows

    if normalize:
        # F.normalize(p=2, dim=2): y / max(||y||, eps), eps = 1e-12.
        # Padded output columns are zero (zero W columns / bias pad), so they
        # do not perturb the norm.
        sumsq = jnp.sum(y * y, axis=-1, keepdims=True)
        y = y * jax.lax.rsqrt(jnp.maximum(sumsq, 1e-24))       # EUP rsqrt

    o_ref[...] = y.reshape(tb, n, dp).astype(o_ref.dtype)


def _vmem_limit_bytes():
    """Per-generation scoped-VMEM limit: ~3/4 of physical capacity."""
    try:
        cap = int(pltpu.get_tpu_info().vmem_capacity_bytes)
    except Exception:
        cap = 64 * 1024 * 1024            # conservative default (v7x per-TC)
    return max(16 * 1024 * 1024, (cap * 3) // 4)


def _step_vmem_bytes(tb, N, Din, Dp, in_itemsize, reorder):
    """VMEM per grid step: double-buffered DMA blocks + in-kernel intermediates."""
    rows = tb * N
    width = Dp if reorder else Din
    dma = (2 * tb * N * N * in_itemsize       # adj block (double-buffered)
           + 2 * rows * Din * in_itemsize     # x block
           + 2 * rows * Dp * 4                # out block (f32)
           + 2 * Din * Dp * 2                 # weight bf16 (count 2 buffers, safe)
           + 2 * Dp * 4)                      # bias f32
    interm = (tb * N * N * 2                  # adj -> bf16
              + rows * Din * 2                # x -> bf16
              + rows * width * 4              # aggregation result (f32)
              + rows * width * 2              # -> bf16 feed for second matmul
              + 2 * rows * Dp * 4)            # y f32 + epilogue temporaries
    return dma + interm


def _pick_tb(B, N, Din, Dp, in_itemsize, reorder, budget):
    """Graphs per grid step: fill the MXU M dim, keep >=2 grid steps, fit VMEM,
    and prefer a divisor of B so no batch-padding copy is needed."""
    target_rows = 2048                        # amortize ~0.35us/step overhead
    tb_cap = max(1, target_rows // max(N, 1))
    if B >= 2:
        tb_cap = min(tb_cap, -(-B // 2))      # >=2 steps -> both TCs busy (v7x)
    tb_cap = min(tb_cap, B)

    def fits(t):
        return _step_vmem_bytes(t, N, Din, Dp, in_itemsize, reorder) <= budget

    best_div = 0
    for d in range(1, tb_cap + 1):
        if B % d == 0 and fits(d):
            best_div = d
    if best_div:
        return best_div, B                    # no padding
    t = tb_cap
    while t > 1 and not fits(t):
        t -= 1
    return t, -(-B // t) * t                  # rare fallback: pad batch


def graph_conv(x, adj, weight, bias=None, *, add_self=False,
               normalize_embedding=False):
    """Pallas GraphConv forward.  x: (B,N,Din), adj: (B,N,N), weight: (Din,Dout)."""
    # TODO(synk): dropout (nn.Dropout) not implemented; module default dropout=0.0.
    # TODO(synk): very large N (adjacency block > VMEM budget) would need an
    #             extra "arbitrary" reduction grid axis over neighbors.
    # TODO(synk): for N<=32 and huge B, block-diagonal packing of several graphs
    #             into one adjacency tile would improve MXU fill further.
    x = jnp.asarray(x)
    adj = jnp.asarray(adj)
    B, N, Din = x.shape
    Dout = weight.shape[1]
    use_bias = bias is not None

    # Lane-dense output: pad Dout to a multiple of 128 (zero columns), slice
    # it back off after the call (removes masked vst stores).
    Dp = -(-Dout // 128) * 128
    reorder = Dp < Din                        # run x@W first when it is narrower

    vmem_limit = _vmem_limit_bytes()
    budget = int(vmem_limit * 0.85)           # headroom for compiler scratch
    in_itemsize = max(x.dtype.itemsize, adj.dtype.itemsize)
    TB, Bp = _pick_tb(B, N, Din, Dp, in_itemsize, reorder, budget)

    adj_in, x_in = adj, x                     # native dtype; cast to bf16 in-kernel
    if Bp != B:                               # fallback only (no divisor fit budget)
        adj_in = jnp.pad(adj_in, ((0, Bp - B), (0, 0), (0, 0)))
        x_in = jnp.pad(x_in, ((0, Bp - B), (0, 0), (0, 0)))

    w = jnp.asarray(weight, jnp.float32)
    if Dp != Dout:
        w = jnp.pad(w, ((0, 0), (0, Dp - Dout)))
    w = w.astype(jnp.bfloat16)

    operands = [adj_in, x_in, w]
    in_specs = [
        pl.BlockSpec((TB, N, N), lambda b: (b, 0, 0)),        # adj
        pl.BlockSpec((TB, N, Din), lambda b: (b, 0, 0)),      # x
        # Grid-invariant block index -> Pallas fetches it once and keeps it.
        pl.BlockSpec((Din, Dp), lambda b: (0, 0)),            # weight
    ]
    if use_bias:
        b_arr = jnp.asarray(bias, jnp.float32).reshape(1, Dout)
        if Dp != Dout:
            b_arr = jnp.pad(b_arr, ((0, 0), (0, Dp - Dout)))
        operands.append(b_arr)
        in_specs.append(pl.BlockSpec((1, Dp), lambda b: (0, 0)))  # bias (invariant)

    kernel = functools.partial(
        _graphconv_kernel,
        add_self=add_self,
        use_bias=use_bias,
        normalize=normalize_embedding,
        reorder=reorder,
    )

    width = Dp if reorder else Din
    flops = 2 * Bp * N * N * width + 2 * Bp * N * Din * Dp
    transcendentals = Bp * N if normalize_embedding else 0
    bytes_accessed = (adj_in.size * adj_in.dtype.itemsize
                      + x_in.size * x_in.dtype.itemsize
                      + w.size * w.dtype.itemsize
                      + (Dp * 4 if use_bias else 0)
                      + Bp * N * Dp * 4)

    out = pl.pallas_call(
        kernel,
        out_shape=jax.ShapeDtypeStruct((Bp, N, Dp), jnp.float32),
        grid_spec=pltpu.PrefetchScalarGridSpec(
            num_scalar_prefetch=0,
            grid=(Bp // TB,),
            in_specs=in_specs,
            out_specs=pl.BlockSpec((TB, N, Dp), lambda b: (b, 0, 0)),
        ),
        compiler_params=pltpu.CompilerParams(
            dimension_semantics=("parallel",),
            vmem_limit_bytes=vmem_limit,
        ),
        cost_estimate=pl.CostEstimate(
            flops=flops,
            transcendentals=transcendentals,
            bytes_accessed=bytes_accessed,
        ),
    )(*operands)

    if Bp != B or Dp != Dout:
        out = out[:B, :, :Dout]
    return out


if __name__ == "__main__":
    key = jax.random.PRNGKey(0)
    keys = jax.random.split(key, 7)

    # Config 1: default flags (bias=True, add_self=False, normalize=False).
    B, N, Din, Dout = 2, 16, 32, 32
    x = jax.random.normal(keys[0], (B, N, Din), dtype=jnp.float32)
    adj = jax.random.uniform(keys[1], (B, N, N), dtype=jnp.float32)
    weight = jax.random.normal(keys[2], (Din, Dout), dtype=jnp.float32) * 0.1
    bias = jax.random.normal(keys[3], (Dout,), dtype=jnp.float32) * 0.1

    out = jax.block_until_ready(graph_conv(x, adj, weight, bias))
    ref = jnp.matmul(jnp.matmul(adj, x), weight) + bias
    assert out.shape == (B, N, Dout)
    # MXU inputs are bf16 with f32 accumulation -> loose tolerance vs f32 ref.
    assert jnp.allclose(out, ref, atol=5e-2, rtol=5e-2)

    # Config 2: add_self + normalize_embedding path.
    out2 = jax.block_until_ready(
        graph_conv(x, adj, weight, bias, add_self=True, normalize_embedding=True))
    ref2 = jnp.matmul(adj, x) + x
    ref2 = jnp.matmul(ref2, weight) + bias
    ref2 = ref2 / jnp.maximum(jnp.linalg.norm(ref2, axis=2, keepdims=True), 1e-12)
    assert out2.shape == (B, N, Dout)
    assert jnp.allclose(out2, ref2, atol=5e-2, rtol=5e-2)

    # Config 3: reordered-matmul path (Dout < Din), no bias, add_self=True.
    B3, N3, Din3, Dout3 = 3, 16, 256, 32
    x3 = jax.random.normal(keys[4], (B3, N3, Din3), dtype=jnp.float32)
    adj3 = jax.random.uniform(keys[5], (B3, N3, N3), dtype=jnp.float32)
    w3 = jax.random.normal(keys[6], (Din3, Dout3), dtype=jnp.float32) * 0.05
    out3 = jax.block_until_ready(graph_conv(x3, adj3, w3, None, add_self=True))
    ref3 = jnp.matmul(jnp.matmul(adj3, x3) + x3, w3)
    assert out3.shape == (B3, N3, Dout3)
    assert jnp.allclose(out3, ref3, atol=5e-2, rtol=5e-2)

    print("KERNEL_OK")
</pallas_src>

<mosaic_0001>
module attributes {stable_mosaic.version = 11 : i64} {
  func.func @_graphconv_kernel(%arg0: i32, %arg1: memref<1x16x16xf32, #tpu.memory_space<vmem>>, %arg2: memref<1x16x32xf32, #tpu.memory_space<vmem>>, %arg3: memref<32x128xbf16, #tpu.memory_space<vmem>>, %arg4: memref<1x128xf32, #tpu.memory_space<vmem>>, %arg5: memref<1x16x128xf32, #tpu.memory_space<vmem>>) attributes {dimension_semantics = [#tpu.dimension_semantics<parallel>], iteration_bounds = array<i64: 2>, scalar_prefetch = 0 : i64, scratch_operands = 0 : i64, tpu.core_type = #tpu.core_type<tc>, window_params = [{transform_indices = @transform_0, window_bounds = array<i64: 1, 16, 16>}, {transform_indices = @transform_1, window_bounds = array<i64: 1, 16, 32>}, {pipeline_mode = #tpu.pipeline_mode<synchronous>, transform_indices = @transform_2, window_bounds = array<i64: 32, 128>}, {pipeline_mode = #tpu.pipeline_mode<synchronous>, transform_indices = @transform_3, window_bounds = array<i64: 1, 128>}, {transform_indices = @transform_4, window_bounds = array<i64: 1, 16, 128>}]} {
    %c0 = arith.constant 0 : index
    %c0_0 = arith.constant 0 : index
    %c0_1 = arith.constant 0 : index
    %0 = vector.load %arg1[%c0, %c0_0, %c0_1] : memref<1x16x16xf32, #tpu.memory_space<vmem>>, vector<1x16x16xf32>
    %1 = arith.truncf %0 : vector<1x16x16xf32> to vector<1x16x16xbf16>
    %c0_2 = arith.constant 0 : index
    %c0_3 = arith.constant 0 : index
    %c0_4 = arith.constant 0 : index
    %2 = vector.load %arg2[%c0_2, %c0_3, %c0_4] : memref<1x16x32xf32, #tpu.memory_space<vmem>>, vector<1x16x32xf32>
    %3 = arith.truncf %2 : vector<1x16x32xf32> to vector<1x16x32xbf16>
    "tpu.trace_start"() <{level = 10 : i32, message = "bnm,bmd->bnd"}> : () -> ()
    %cst = arith.constant dense<0.000000e+00> : vector<1x16x32xf32>
    %4 = tpu.matmul %1, %3, %cst {dimension_numbers = #tpu.dot_dimension_numbers<[2], [1], [1], [2], [0, 0, 0, 1, 1, 2], [0], [0]>} : vector<1x16x16xbf16>, vector<1x16x32xbf16>, vector<1x16x32xf32> -> vector<1x16x32xf32>
    "tpu.trace_stop"() : () -> ()
    %5 = vector.shape_cast %4 : vector<1x16x32xf32> to vector<16x32xf32>
    %6 = arith.truncf %5 : vector<16x32xf32> to vector<16x32xbf16>
    %c0_5 = arith.constant 0 : index
    %c0_6 = arith.constant 0 : index
    %7 = vector.load %arg3[%c0_5, %c0_6] : memref<32x128xbf16, #tpu.memory_space<vmem>>, vector<32x128xbf16>
    %cst_7 = arith.constant dense<0.000000e+00> : vector<16x128xf32>
    %8 = tpu.matmul %6, %7, %cst_7 {dimension_numbers = #tpu.dot_dimension_numbers<[1], [0], [0], [1], [0, 0, 1, 1], [], []>} : vector<16x32xbf16>, vector<32x128xbf16>, vector<16x128xf32> -> vector<16x128xf32>
    %c0_8 = arith.constant 0 : index
    %c0_9 = arith.constant 0 : index
    %9 = vector.load %arg4[%c0_8, %c0_9] : memref<1x128xf32, #tpu.memory_space<vmem>>, vector<1x128xf32>
    %10 = vector.broadcast %9 : vector<1x128xf32> to vector<16x128xf32>
    %11 = arith.addf %8, %10 : vector<16x128xf32>
    %12 = vector.shape_cast %11 : vector<16x128xf32> to vector<1x16x128xf32>
    %c0_10 = arith.constant 0 : index
    %c0_11 = arith.constant 0 : index
    %c0_12 = arith.constant 0 : index
    %13 = vector.load %arg5[%c0_10, %c0_11, %c0_12] : memref<1x16x128xf32, #tpu.memory_space<vmem>>, vector<1x16x128xf32>
    tpu.vector_store %arg5[%c0_10, %c0_11, %c0_12], %12 {strides = array<i32>} : memref<1x16x128xf32, #tpu.memory_space<vmem>>, vector<1x16x128xf32>,
    return
  }
  func.func @transform_0(%arg0: i32) -> (i32, i32, i32) {
    %c0_i32 = arith.constant 0 : i32
    %c0_i32_0 = arith.constant 0 : i32
    %c0_i32_1 = arith.constant 0 : i32
    return %arg0, %c0_i32, %c0_i32_0 : i32, i32, i32
  }
  func.func @transform_1(%arg0: i32) -> (i32, i32, i32) {
    %c0_i32 = arith.constant 0 : i32
    %c0_i32_0 = arith.constant 0 : i32
    %c0_i32_1 = arith.constant 0 : i32
    return %arg0, %c0_i32, %c0_i32_0 : i32, i32, i32
  }
  func.func @transform_2(%arg0: i32) -> (i32, i32) {
    %c0_i32 = arith.constant 0 : i32
    %c0_i32_0 = arith.constant 0 : i32
    %c0_i32_1 = arith.constant 0 : i32
    return %c0_i32, %c0_i32_0 : i32, i32
  }
  func.func @transform_3(%arg0: i32) -> (i32, i32) {
    %c0_i32 = arith.constant 0 : i32
    %c0_i32_0 = arith.constant 0 : i32
    %c0_i32_1 = arith.constant 0 : i32
    return %c0_i32, %c0_i32_0 : i32, i32
  }
  func.func @transform_4(%arg0: i32) -> (i32, i32, i32) {
    %c0_i32 = arith.constant 0 : i32
    %c0_i32_0 = arith.constant 0 : i32
    %c0_i32_1 = arith.constant 0 : i32
    return %arg0, %c0_i32, %c0_i32_0 : i32, i32, i32
  }
}

</mosaic_0001>

<llo_original>
// kernel: tpu_custom_call.1
$region0: #{tpu_custom_call.1}
  #allocation0 [shape = 'u32[]', space=smem, size = 0x4, offset = 0x4, fixed_abs, tag = 'smem constant byte address 0x4 - core index']
  #allocation1 [shape = 'u32[72,128]{1,0:T(1,128)}', space=vmem, size = 0x9000, scoped, tag = 'internal scratch']
  %s0 = inlined_call_operand.hbm [shape: f32[2,16,16], index: 0, kind: input, shape index: {}]
  %s1 = inlined_call_operand.hbm [shape: f32[2,16,32], index: 1, kind: input, shape index: {}]
  %s2 = inlined_call_operand.hbm [shape: bf16[32,128], index: 2, kind: input, shape index: {}]
  %s3 = inlined_call_operand.vmem [shape: f32[1,128], index: 3, kind: input, shape index: {}]
  %s4 = inlined_call_operand.hbm [shape: f32[2,16,128], index: 4, kind: output, shape index: {}]
  %s5 = sld [smem:[#allocation0]]
  $region61: #{tpu_custom_call.1} parent=0
    _
  %s7 = ssub.s32 1, %s5
  %s8 = scalar_select 0, %s7, %s5
  $region1: #{tpu_custom_call.1} parent=0
    #allocation2 [shape = 'u8[16384]{0}', space=vmem, size = 0x4000, scoped, tag = 'input window, operand 0']
    #allocation3 [shape = 's32[2]{0}', space=sflag, size = 0x8, scoped, tag = 'scoped memory for tpu_custom_call.1']
    #allocation4 [shape = 's32[2]{0}', space=sflag, size = 0x8, scoped, tag = 'scoped memory for tpu_custom_call.1']
    #allocation5 [shape = 'u8[16384]{0}', space=vmem, size = 0x4000, scoped, tag = 'input window, operand 1']
    #allocation6 [shape = 's32[2]{0}', space=sflag, size = 0x8, scoped, tag = 'scoped memory for tpu_custom_call.1']
    #allocation7 [shape = 'u8[8192]{0}', space=vmem, size = 0x2000, scoped, tag = 'input window, operand 2, single buffered']
    #allocation8 [shape = 'u8[16384]{0}', space=vmem, size = 0x4000, scoped, tag = 'output window, operand 0']
    %9 = vsyncpa [#allocation3], 0
    %s10 = scalar_lea.sflag [#allocation3], 1
    %11 = vsyncpa %s10, 0
    %12 = vsyncpa [#allocation6], 0
    %s13 = scalar_lea.sflag [#allocation6], 1
    %14 = vsyncpa %s13, 0
    %15 = vsyncpa [#allocation4], 0
    %s16 = scalar_lea.sflag [#allocation4], 1
    %17 = vsyncpa %s16, 0
    loop: start=0, step=1, limit=4
    $region2: #{tpu_custom_call.1} parent=1 // loop_pre_header
      _
    $region3: #{tpu_custom_call.1} parent=1 // loop_header
      %s19 = sphi 0, %s23
      %p20 = scmp.ge.s32.totalorder %s19, 4
      %s29 = sphi 0, %s31
      %s32 = sphi 0, %s29
      %s33 = sphi 0, %s32
      %s49 = sphi 0, %s33
      %s55 = sphi 0, %s57
      %s58 = sphi 0, %s55
      %s59 = sphi 0, %s58
      %s75 = sphi 0, %s59
      %s79 = sphi 0, %s79
      %s81 = sphi 0, %s79
      %s82 = sphi 0, %s81
      %s96 = sphi 0, %s82
      %s100 = sphi 0, %s100
      %s102 = sphi 0, %s100
      %s103 = sphi 0, %s102
      %s117 = sphi 0, %s103
      %s123 = sphi 0, %s125
      %s126 = sphi 0, %s123
      %s127 = sphi 0, %s126
      %s143 = sphi 0, %s127
    $region4: #{tpu_custom_call.1} parent=1 // loop_header_branch
      %22 = sbr.rel (%p20) target = $region8
    $region5: #{tpu_custom_call.1} parent=1 // loop_body
      %s24 = ssub.s32 %s19, 1
      %s25 = ssub.s32 %s19, 2
      %s26 = sadd.s32 %s19, 1
      %s27 = ssub.s32 %s19, %s26
      %p28 = scmp.eq.s32.totalorder %s27, 0
      %s30 = sadd.s32 %s29, 1
      %s31 = scalar_select %p28, %s29, %s30
      %p34 = pneg %p28
      %p35 = scmp.eq.s32.totalorder %s19, 1
      %p36 = por %p34, %p35
      %p37 = scmp.ne.s32.totalorder %s29, %s32
      %p38 = scmp.eq.s32.totalorder %s19, 0
      %p39 = por %p37, %p38
      %p40 = scmp.ne.s32.totalorder %s29, %s32
      %p41 = scmp.eq.s32.totalorder %s24, 1
      %p42 = por %p40, %p41
      %p43 = scmp.ne.s32.totalorder %s32, %s33
      %p44 = scmp.eq.s32.totalorder %s24, 0
      %p45 = por %p43, %p44
      %p46 = scmp.ne.s32.totalorder %s32, %s33
      %p47 = scmp.eq.s32.totalorder %s25, 1
      %p48 = por %p46, %p47
      %p50 = scmp.ne.s32.totalorder %s33, %s49
      %p51 = scmp.eq.s32.totalorder %s25, 0
      %p52 = por %p50, %p51
      %s53 = ssub.s32 %s19, %s26
      %p54 = scmp.eq.s32.totalorder %s53, 0
      %s56 = sadd.s32 %s55, 1
      %s57 = scalar_select %p54, %s55, %s56
      %p60 = pneg %p54
      %p61 = scmp.eq.s32.totalorder %s19, 1
      %p62 = por %p60, %p61
      %p63 = scmp.ne.s32.totalorder %s55, %s58
      %p64 = scmp.eq.s32.totalorder %s19, 0
      %p65 = por %p63, %p64
      %p66 = scmp.ne.s32.totalorder %s55, %s58
      %p67 = scmp.eq.s32.totalorder %s24, 1
      %p68 = por %p66, %p67
      %p69 = scmp.ne.s32.totalorder %s58, %s59
      %p70 = scmp.eq.s32.totalorder %s24, 0
      %p71 = por %p69, %p70
      %p72 = scmp.ne.s32.totalorder %s58, %s59
      %p73 = scmp.eq.s32.totalorder %s25, 1
      %p74 = por %p72, %p73
      %p76 = scmp.ne.s32.totalorder %s59, %s75
      %p77 = scmp.eq.s32.totalorder %s25, 0
      %p78 = por %p76, %p77
      %s80 = sadd.s32 %s79, 1
      %p83 = scmp.eq.s32.totalorder %s19, 1
      %p84 = scmp.ne.s32.totalorder %s79, %s81
      %p85 = scmp.eq.s32.totalorder %s19, 0
      %p86 = por %p84, %p85
      %p87 = scmp.ne.s32.totalorder %s79, %s81
      %p88 = scmp.eq.s32.totalorder %s24, 1
      %p89 = por %p87, %p88
      %p90 = scmp.ne.s32.totalorder %s81, %s82
      %p91 = scmp.eq.s32.totalorder %s24, 0
      %p92 = por %p90, %p91
      %p93 = scmp.ne.s32.totalorder %s81, %s82
      %p94 = scmp.eq.s32.totalorder %s25, 1
      %p95 = por %p93, %p94
      %p97 = scmp.ne.s32.totalorder %s82, %s96
      %p98 = scmp.eq.s32.totalorder %s25, 0
      %p99 = por %p97, %p98
      %s101 = sadd.s32 %s100, 1
      %p104 = scmp.eq.s32.totalorder %s19, 1
      %p105 = scmp.ne.s32.totalorder %s100, %s102
      %p106 = scmp.eq.s32.totalorder %s19, 0
      %p107 = por %p105, %p106
      %p108 = scmp.ne.s32.totalorder %s100, %s102
      %p109 = scmp.eq.s32.totalorder %s24, 1
      %p110 = por %p108, %p109
      %p111 = scmp.ne.s32.totalorder %s102, %s103
      %p112 = scmp.eq.s32.totalorder %s24, 0
      %p113 = por %p111, %p112
      %p114 = scmp.ne.s32.totalorder %s102, %s103
      %p115 = scmp.eq.s32.totalorder %s25, 1
      %p116 = por %p114, %p115
      %p118 = scmp.ne.s32.totalorder %s103, %s117
      %p119 = scmp.eq.s32.totalorder %s25, 0
      %p120 = por %p118, %p119
      %s121 = ssub.s32 %s19, %s26
      %p122 = scmp.eq.s32.totalorder %s121, 0
      %s124 = sadd.s32 %s123, 1
      %s125 = scalar_select %p122, %s123, %s124
      %p128 = pneg %p122
      %p129 = scmp.eq.s32.totalorder %s19, 1
      %p130 = por %p128, %p129
      %p131 = scmp.ne.s32.totalorder %s123, %s126
      %p132 = scmp.eq.s32.totalorder %s19, 0
      %p133 = por %p131, %p132
      %p134 = scmp.ne.s32.totalorder %s123, %s126
      %p135 = scmp.eq.s32.totalorder %s24, 1
      %p136 = por %p134, %p135
      %p137 = scmp.ne.s32.totalorder %s126, %s127
      %p138 = scmp.eq.s32.totalorder %s24, 0
      %p139 = por %p137, %p138
      %p140 = scmp.ne.s32.totalorder %s126, %s127
      %p141 = scmp.eq.s32.totalorder %s25, 1
      %p142 = por %p140, %p141
      %p144 = scmp.ne.s32.totalorder %s127, %s143
      %p145 = scmp.eq.s32.totalorder %s25, 0
      %p146 = por %p144, %p145
      %p147 = scmp.le.s32.totalorder 1, %s19
      %p148 = scmp.lt.s32.totalorder %s19, 3
      %p149 = pnand %p147, %p148
      %p150 = pneg %p149
      // Predicated region
      $region9: #{tpu_custom_call.1} parent=5 // pred_check
        _
      $region10: #{tpu_custom_call.1} parent=5 // pred_check_branch
        %152 = sbr.rel (%p149) target = $region12
      $region11: #{tpu_custom_call.1} parent=5 // pred_region
        %s153 = ssub.s32 %s19, 1
        // Predicated region
        $region13: #{tpu_custom_call.1} parent=11 // pred_check
          %p154 = pneg %p92
        $region14: #{tpu_custom_call.1} parent=11 // pred_check_branch
          %156 = sbr.rel (%p154) target = $region16
        $region15: #{tpu_custom_call.1} parent=11 // pred_region
          %158 = vsyncadd [#allocation6], 0
          %s159 = sshll.u32 %s2, 4
          %s160 = int_to_ptr.hbm [resolvable:$true] %s159
          %s161 = sshll.u32 [#allocation7], 4
          %s162 = int_to_ptr.vmem [resolvable:$true] %s161
          %167 = dma.hbm_to_vmem [thread:$0]  %s160, 256, %s162, [#allocation6], 64, 64, 4
        $region16: #{tpu_custom_call.1} parent=11 // pred_fallthru
          _
        // Predicated region
        $region17: #{tpu_custom_call.1} parent=11 // pred_check
          %p168 = pneg %p113
        $region18: #{tpu_custom_call.1} parent=11 // pred_check_branch
          %170 = sbr.rel (%p168) target = $region20
        $region19: #{tpu_custom_call.1} parent=11 // pred_region
          _
        $region20: #{tpu_custom_call.1} parent=11 // pred_fallthru
          _
      $region12: #{tpu_custom_call.1} parent=5 // pred_fallthru
        _
      %p171 = scmp.lt.s32.totalorder %s19, 2
      // Predicated region
      $region21: #{tpu_custom_call.1} parent=5 // pred_check
        %p172 = pneg %p171
      $region22: #{tpu_custom_call.1} parent=5 // pred_check_branch
        %174 = sbr.rel (%p172) target = $region24
      $region23: #{tpu_custom_call.1} parent=5 // pred_region
        // Predicated region
        $region25: #{tpu_custom_call.1} parent=23 // pred_check
          %p175 = pneg %p39
        $region26: #{tpu_custom_call.1} parent=23 // pred_check_branch
          %177 = sbr.rel (%p175) target = $region28
        $region27: #{tpu_custom_call.1} parent=23 // pred_region
          %s178 = sand.u32 %s29, 1
          %s179 = scalar_lea.sflag [#allocation3], %s178
          %s180 = sand.u32 %s29, 1
          %s181 = smul.addr %s180, 16
          %s182 = scalar_lea.vmem [#allocation2], %s181
          %184 = vsyncadd %s179, 0
          %s185 = smul.addr %s19, 2
          %s186 = smul.addr %s185, 8
          %s187 = scalar_lea.hbm %s0, %s186
          %s188 = sshll.u32 %s187, 4
          %s189 = int_to_ptr.hbm [resolvable:$true] %s188
          %s190 = sshll.u32 %s182, 4
          %s191 = int_to_ptr.vmem [resolvable:$true] %s190
          %196 = dma.hbm_to_vmem [thread:$0]  %s189, 256, %s191, %s179, 128, 128, 8
        $region28: #{tpu_custom_call.1} parent=23 // pred_fallthru
          _
        // Predicated region
        $region29: #{tpu_custom_call.1} parent=23 // pred_check
          %p197 = pneg %p65
        $region30: #{tpu_custom_call.1} parent=23 // pred_check_branch
          %199 = sbr.rel (%p197) target = $region32
        $region31: #{tpu_custom_call.1} parent=23 // pred_region
          %s200 = sand.u32 %s19, 1
          %s201 = scalar_lea.sflag [#allocation6], %s200
          %s202 = sand.u32 %s55, 1
          %s203 = smul.addr %s202, 16
          %s204 = scalar_lea.vmem [#allocation5], %s203
          %206 = vsyncadd %s201, 0
          %s207 = smul.addr %s19, 2
          %s208 = smul.addr %s207, 8
          %s209 = scalar_lea.hbm %s1, %s208
          %s210 = sshll.u32 %s209, 4
          %s211 = int_to_ptr.hbm [resolvable:$true] %s210
          %s212 = sshll.u32 %s204, 4
          %s213 = int_to_ptr.vmem [resolvable:$true] %s212
          %218 = dma.hbm_to_vmem [thread:$0]  %s211, 256, %s213, %s201, 128, 128, 8
        $region32: #{tpu_custom_call.1} parent=23 // pred_fallthru
          _
      $region24: #{tpu_custom_call.1} parent=5 // pred_fallthru
        _
      %p219 = scmp.le.s32.totalorder 1, %s19
      %p220 = scmp.lt.s32.totalorder %s19, 3
      %p221 = pnand %p219, %p220
      %p222 = pneg %p221
      // Predicated region
      $region33: #{tpu_custom_call.1} parent=5 // pred_check
        _
      $region34: #{tpu_custom_call.1} parent=5 // pred_check_branch
        %224 = sbr.rel (%p221) target = $region36
      $region35: #{tpu_custom_call.1} parent=5 // pred_region
        %s225 = ssub.s32 %s19, 1
        %s226 = sand.u32 %s32, 1
        %s227 = scalar_lea.sflag [#allocation3], %s226
        %s228 = sand.u32 %s32, 1
        %s229 = smul.addr %s228, 16
        %s230 = scalar_lea.vmem [#allocation2], %s229
        // Predicated region
        $region37: #{tpu_custom_call.1} parent=35 // pred_check
          %p231 = pneg %p45
        $region38: #{tpu_custom_call.1} parent=35 // pred_check_branch
          %233 = sbr.rel (%p231) target = $region40
        $region39: #{tpu_custom_call.1} parent=35 // pred_region
          %235 = dma.done %s227, 256
        $region40: #{tpu_custom_call.1} parent=35 // pred_fallthru
          _
        %s236 = sand.u32 %s24, 1
        %s237 = scalar_lea.sflag [#allocation6], %s236
        %s238 = sand.u32 %s58, 1
        %s239 = smul.addr %s238, 16
        %s240 = scalar_lea.vmem [#allocation5], %s239
        // Predicated region
        $region41: #{tpu_custom_call.1} parent=35 // pred_check
          %p241 = pneg %p71
        $region42: #{tpu_custom_call.1} parent=35 // pred_check_branch
          %243 = sbr.rel (%p241) target = $region44
        $region43: #{tpu_custom_call.1} parent=35 // pred_region
          %245 = dma.done %s237, 256
        $region44: #{tpu_custom_call.1} parent=35 // pred_fallthru
          _
        // Predicated region
        $region45: #{tpu_custom_call.1} parent=35 // pred_check
          %p246 = pneg %p92
        $region46: #{tpu_custom_call.1} parent=35 // pred_check_branch
          %248 = sbr.rel (%p246) target = $region48
        $region47: #{tpu_custom_call.1} parent=35 // pred_region
          %250 = dma.done [#allocation6], 256
        $region48: #{tpu_custom_call.1} parent=35 // pred_fallthru
          _
        %s251 = sand.u32 %s32, 1
        %s252 = scalar_lea.sflag [#allocation3], %s251
        %s253 = sand.u32 %s32, 1
        %s254 = smul.addr %s253, 16
        %s255 = scalar_lea.vmem [#allocation2], %s254
        %p256 = pneg %p45
        %p257 = pneg %p42
        %s258 = sand.u32 %s24, 1
        %s259 = scalar_lea.sflag [#allocation6], %s258
        %s260 = sand.u32 %s58, 1
        %s261 = smul.addr %s260, 16
        %s262 = scalar_lea.vmem [#allocation5], %s261
        %p263 = pneg %p71
        %p264 = pneg %p68
        %p265 = pneg %p92
        %p266 = pneg %p89
        %p267 = pneg %p113
        %p268 = pneg %p110
        %p269 = pneg %p139
        %p270 = pneg %p136
        %s271 = sand.u32 %s126, 1
        %s272 = scalar_lea.sflag [#allocation4], %s271
        %s273 = sand.u32 %s126, 1
        %s274 = smul.addr %s273, 16
        %s275 = scalar_lea.vmem [#allocation8], %s274
        %v277 = vld [vmem:[%s230] sm:$0xff]
        %v278 = vld [vmem:[%s230 + $0x8] sm:$0xff]
        %v279 = vpack.c.bf16 %v277, %v277
        %v280 = vpack.c.bf16 %v278, %v278
        %v281 = vld [vmem:[%s240] sm:$0xff]
        %v282 = vld [vmem:[%s240 + $0x8] sm:$0xff]
        %v283 = vpack.c.bf16 %v281, %v281
        %v284 = vpack.c.bf16 %v282, %v282
        %v287 = vunpack.c.l.b16 %v279
        %v288 = vunpack.c.l.b16 %v280
        %v289 = vpack.c.b16 %v288, %v287
        %v292 = vunpack.c.l.b16 %v283
        %v293 = vunpack.c.l.b16 %v284
        %v294 = vpack.c.b16 %v293, %v292
        %vm296 = vcmask 130048
        %v298 = vsel %vm296, %v289, 0
        %300 = vmatpush.bf16.msra.mxu0 0
        %301 = vmatpush.bf16.msra.mxu0 0
        %302 = vmatpush.bf16.msra.mxu0 0
        %303 = vmatpush.bf16.msra.mxu0 0
        %304 = vmatpush.bf16.msra.mxu0 0
        %305 = vmatpush.bf16.msra.mxu0 0
        %306 = vmatpush.bf16.msra.mxu0 0
        %307 = vmatpush.bf16.msra.mxu0 %v294
        %308 = vmatmul.bf16.gmra.mxu0 %v298
        %v309 = vpop.f32.mrf.mxu0
        %v310 = vadd.f32 0.0, %v309
        %v311 = vpop.f32.mrf.mxu0
        %v312 = vadd.f32 0.0, %v311
        %313 = vdwg.mxu0
        %v314 = vpack.c.bf16 %v312, %v310
        %v315 = vld [vmem:[#allocation7] sm:$0xf]
        %v316 = vld [vmem:[#allocation7 + $0x4] sm:$0xf]
        %v317 = vld [vmem:[#allocation7 + $0x8] sm:$0xf]
        %v318 = vld [vmem:[#allocation7 + $0xc] sm:$0xf]
        %v319 = vld [vmem:[%s3] sm:$0x1]
        %v321 = vperm.slane %v319, 0
        %v327 = vunpack.c.l.b16 %v315
        %v328 = vunpack.c.l.b16 %v316
        %v329 = vunpack.c.l.b16 %v317
        %v330 = vunpack.c.l.b16 %v318
        %v331 = vpack.c.b16 %v328, %v327
        %v332 = vpack.c.b16 %v330, %v329
        %vm335 = vcmask 261120
        %v337 = vsel %vm335, %v314, 0
        %339 = vmatpush.bf16.msra.mxu0 0
        %340 = vmatpush.bf16.msra.mxu0 0
        %341 = vmatpush.bf16.msra.mxu0 0
        %342 = vmatpush.bf16.msra.mxu0 0
        %343 = vmatpush.bf16.msra.mxu0 0
        %344 = vmatpush.bf16.msra.mxu0 0
        %345 = vmatpush.bf16.msra.mxu0 %v332
        %346 = vmatpush.bf16.msra.mxu0 %v331
        %347 = vmatmul.bf16.gmra.mxu0 %v337
        %v348 = vpop.f32.mrf.mxu0
        %v349 = vadd.f32 %v321, %v348
        %v350 = vpop.f32.mrf.mxu0
        %v351 = vadd.f32 %v321, %v350
        %352 = vdwg.mxu0
        %353 = vst [vmem:[%s275] sm:$0xff] %v349
        %354 = vst [vmem:[%s275 + $0x8] sm:$0xff] %v351
        %s355 = sand.u32 %s126, 1
        %s356 = scalar_lea.sflag [#allocation4], %s355
        %s357 = sand.u32 %s126, 1
        %s358 = smul.addr %s357, 16
        %s359 = scalar_lea.vmem [#allocation8], %s358
        // Predicated region
        $region49: #{tpu_custom_call.1} parent=35 // pred_check
          %p360 = pneg %p136
        $region50: #{tpu_custom_call.1} parent=35 // pred_check_branch
          %362 = sbr.rel (%p360) target = $region52
        $region51: #{tpu_custom_call.1} parent=35 // pred_region
          %364 = vsyncadd %s356, 0
          %s365 = smul.addr %s24, 2
          %s366 = smul.addr %s365, 8
          %s367 = scalar_lea.hbm %s4, %s366
          %s368 = sshll.u32 %s359, 4
          %s369 = int_to_ptr.vmem [resolvable:$true] %s368
          %s370 = sshll.u32 %s367, 4
          %s371 = int_to_ptr.hbm [resolvable:$true] %s370
          %376 = dma.vmem_to_hbm [thread:$0]  %s369, 256, %s371, %s356, 128, 128, 8
        $region52: #{tpu_custom_call.1} parent=35 // pred_fallthru
          _
      $region36: #{tpu_custom_call.1} parent=5 // pred_fallthru
        _
      %p377 = scmp.le.s32.totalorder 2, %s19
      // Predicated region
      $region53: #{tpu_custom_call.1} parent=5 // pred_check
        %p378 = pneg %p377
      $region54: #{tpu_custom_call.1} parent=5 // pred_check_branch
        %380 = sbr.rel (%p378) target = $region56
      $region55: #{tpu_custom_call.1} parent=5 // pred_region
        %s381 = ssub.s32 %s19, 2
        // Predicated region
        $region57: #{tpu_custom_call.1} parent=55 // pred_check
          %p382 = pneg %p142
        $region58: #{tpu_custom_call.1} parent=55 // pred_check_branch
          %384 = sbr.rel (%p382) target = $region60
        $region59: #{tpu_custom_call.1} parent=55 // pred_region
          %s385 = sand.u32 %s127, 1
          %s386 = scalar_lea.sflag [#allocation4], %s385
          %s387 = sand.u32 %s127, 1
          %s388 = smul.addr %s387, 16
          %s389 = scalar_lea.vmem [#allocation8], %s388
          %391 = dma.done %s386, 256
        $region60: #{tpu_custom_call.1} parent=55 // pred_fallthru
          _
      $region56: #{tpu_custom_call.1} parent=5 // pred_fallthru
        _
    $region6: #{tpu_custom_call.1} parent=1 // loop_footer
      %s23 = sadd.s32 1, %s19
    $region7: #{tpu_custom_call.1} parent=1 // loop_footer_branch
      %18 = sbr.rel target = $region3
    $region8: #{tpu_custom_call.1} parent=1 // loop_exit
      _
    %392 = vsyncpa [#allocation3], 1
    %s393 = scalar_lea.sflag [#allocation3], 1
    %394 = vsyncpa %s393, 1
    %395 = vsyncpa [#allocation6], 1
    %s396 = scalar_lea.sflag [#allocation6], 1
    %397 = vsyncpa %s396, 1
    %398 = vsyncpa [#allocation4], 1
    %s399 = scalar_lea.sflag [#allocation4], 1
    %400 = vsyncpa %s399, 1

</llo_original>
